<compile_context>
chip_gen: v7x
topology: tpu7x:2x2x1
jax: 0.10.0
libtpu: 0.0.40
codegen_flags: <defaults>
</compile_context>

<pallas_src>
import functools

import jax
import jax.numpy as jnp
from jax.experimental import pallas as pl
from jax.experimental.pallas import tpu as pltpu


def _round_up(x, m):
    return (x + m - 1) // m * m


def _wce_kernel(logits_ref, labels_ref, num_ref, den_ref, num_acc, den_acc,
                *, hw, tn, tiles_per_split, full_tiles, needs_mask):
    """One grid step: TN pixels of one (batch, split), accumulate per-lane."""
    s = pl.program_id(1)
    j = pl.program_id(2)

    @pl.when(j == 0)
    def _():
        num_acc[...] = jnp.zeros_like(num_acc)
        den_acc[...] = jnp.zeros_like(den_acc)

    x = logits_ref[...].astype(jnp.float32)        # (C, TN)  classes x pixels
    lbl = labels_ref[...]                          # (1, TN)  int32 targets
    C, TN = x.shape

    # Numerically-stable log-sum-exp over the class (sublane) axis.
    m = jnp.max(x, axis=0, keepdims=True)                        # (1, TN)
    lse = jnp.log(jnp.sum(jnp.exp(x - m), axis=0, keepdims=True)) + m

    # Fused one-hot path: a single compare feeds both contributions.
    cls = jax.lax.broadcasted_iota(jnp.int32, (C, TN), 0)        # (C, TN)
    hit = cls == lbl                                             # (C, TN) bool
    num_contrib = jnp.where(hit, lse - x, 0.0)                   # (C, TN)
    den_contrib = hit.astype(jnp.float32)                        # (C, TN)

    if needs_mask:
        g = s * tiles_per_split + j          # global pixel-tile index (scalar)

        @pl.when(g < full_tiles)             # fully in-range tile: fast path
        def _():
            num_acc[...] += num_contrib
            den_acc[...] += den_contrib

        @pl.when(g >= full_tiles)            # ragged / overflow tile: mask
        def _():
            pix = g * tn + jax.lax.broadcasted_iota(jnp.int32, (1, TN), 1)
            valid = pix < hw                 # (1, TN)
            # NOTE: selects (not multiplies) so garbage lanes (possible
            # Inf/NaN in lse - x) never reach the accumulator.
            num_acc[...] += jnp.where(valid, num_contrib, 0.0)
            den_acc[...] += jnp.where(valid, den_contrib, 0.0)
    else:
        num_acc[...] += num_contrib
        den_acc[...] += den_contrib

    # Fold the per-lane accumulators to per-class scalars once per (b, s).
    @pl.when(j == tiles_per_split - 1)
    def _():
        num_ref[...] = jnp.sum(num_acc[...], axis=1, keepdims=True)   # (C, 1)
        den_ref[...] = jnp.sum(den_acc[...], axis=1, keepdims=True)   # (C, 1)


@functools.partial(jax.jit, static_argnames=("tile_pixels", "num_splits"))
def weighted_cross_entropy(y_pred, y_true, class_weight, *,
                           tile_pixels=32768, num_splits=2):
    """y_pred: [B, C, H, W] float logits; y_true: [B, 1, H, W] int labels.

    Matches torch.nn.CrossEntropyLoss(weight=class_weight)(y_pred, y_true.squeeze(1)):
        loss = sum_i w[t_i] * (-log_softmax(x_i)[t_i]) / sum_i w[t_i]
    """
    B, C, H, W = y_pred.shape
    assert y_true.shape == (B, 1, H, W)
    assert class_weight.shape == (C,)

    HW = H * W
    TN = min(_round_up(tile_pixels, 128), _round_up(HW, 128))
    n_tiles = pl.cdiv(HW, TN)

    # Second parallel axis (keeps both v7x TensorCores busy for small B).
    S = max(1, min(num_splits, n_tiles))
    T = pl.cdiv(n_tiles, S)                 # tiles per split
    full_tiles = HW // TN                   # tiles that are entirely in-range
    needs_mask = (HW % TN != 0) or (S * T != n_tiles)

    # Free reshapes (contiguous) — no transpose, no pad.
    logits = y_pred.reshape(B, C, HW)
    labels = y_true.reshape(B, 1, HW).astype(jnp.int32)

    if S * T == n_tiles:
        def tile_index(s, j):
            return s * T + j
    else:
        # Overflow tiles (past the last real tile) re-read the last tile; the
        # kernel masks their contributions to exactly zero.
        def tile_index(s, j):
            return jnp.minimum(s * T + j, n_tiles - 1)

    kernel = functools.partial(
        _wce_kernel, hw=HW, tn=TN, tiles_per_split=T,
        full_tiles=full_tiles, needs_mask=needs_mask)

    cost = pl.CostEstimate(
        flops=int(8 * B * HW * C),
        transcendentals=int((C + 1) * B * HW),
        bytes_accessed=int(B * HW * (C + 1) * 4 + 2 * B * S * C * 4),
    )

    num, den = pl.pallas_call(
        kernel,
        out_shape=(
            jax.ShapeDtypeStruct((B, S, C, 1), jnp.float32),
            jax.ShapeDtypeStruct((B, S, C, 1), jnp.float32),
        ),
        grid_spec=pltpu.PrefetchScalarGridSpec(
            num_scalar_prefetch=0,
            grid=(B, S, T),
            in_specs=[
                pl.BlockSpec((None, C, TN),
                             lambda b, s, j: (b, 0, tile_index(s, j))),  # logits
                pl.BlockSpec((None, 1, TN),
                             lambda b, s, j: (b, 0, tile_index(s, j))),  # labels
            ],
            out_specs=[
                pl.BlockSpec((None, None, C, 1), lambda b, s, j: (b, s, 0, 0)),
                pl.BlockSpec((None, None, C, 1), lambda b, s, j: (b, s, 0, 0)),
            ],
            scratch_shapes=[
                pltpu.VMEM((C, TN), jnp.float32),   # num accumulator
                pltpu.VMEM((C, TN), jnp.float32),   # den accumulator
            ],
        ),
        compiler_params=pltpu.CompilerParams(
            dimension_semantics=("parallel", "parallel", "arbitrary")),
        cost_estimate=cost,
    )(logits, labels)

    # Tiny wrapper-side reduce: apply the per-class weights here so the kernel
    # inner loop never touches them.
    w = class_weight.astype(jnp.float32)            # (C,)
    num_c = jnp.sum(num, axis=(0, 1, 3))            # (C,)
    den_c = jnp.sum(den, axis=(0, 1, 3))            # (C,)
    return jnp.dot(w, num_c) / jnp.dot(w, den_c)


def _reference(y_pred, y_true, class_weight):
    B, C, H, W = y_pred.shape
    logits = jnp.transpose(y_pred, (0, 2, 3, 1)).reshape(-1, C).astype(jnp.float32)
    labels = y_true.reshape(-1).astype(jnp.int32)
    logp = jax.nn.log_softmax(logits, axis=-1)
    nll = -jnp.take_along_axis(logp, labels[:, None], axis=-1)[:, 0]
    w_t = class_weight[labels]
    return jnp.sum(w_t * nll) / jnp.sum(w_t)


if __name__ == "__main__":
    num_classes = 8
    B, H, W = 2, 16, 16

    key = jax.random.PRNGKey(0)
    k1, k2 = jax.random.split(key)
    y_pred = jax.random.normal(k1, (B, num_classes, H, W), dtype=jnp.float32)
    y_true = jax.random.randint(k2, (B, 1, H, W), 0, num_classes, dtype=jnp.int32)

    # Deterministic non-uniform per-class weights (module default would be ones).
    class_weight = 0.5 + 0.25 * jnp.arange(num_classes, dtype=jnp.float32)

    loss = weighted_cross_entropy(y_pred, y_true, class_weight)
    loss = jax.block_until_ready(loss)

    ref = _reference(y_pred, y_true, class_weight)
    assert jnp.allclose(loss, ref, rtol=1e-5, atol=1e-5), (loss, ref)

    print("KERNEL_OK")
</pallas_src>

<mosaic_0001>
module attributes {stable_mosaic.version = 11 : i64} {
  func.func @_wce_kernel(%arg0: i32, %arg1: i32, %arg2: i32, %arg3: memref<1x8x256xf32, #tpu.memory_space<vmem>>, %arg4: memref<1x1x256xi32, #tpu.memory_space<vmem>>, %arg5: memref<1x1x8x1xf32, #tpu.memory_space<vmem>>, %arg6: memref<1x1x8x1xf32, #tpu.memory_space<vmem>>, %arg7: memref<8x256xf32, #tpu.memory_space<vmem>>, %arg8: memref<8x256xf32, #tpu.memory_space<vmem>>) attributes {dimension_semantics = [#tpu.dimension_semantics<parallel>, #tpu.dimension_semantics<parallel>, #tpu.dimension_semantics<arbitrary>], iteration_bounds = array<i64: 2, 1, 1>, scalar_prefetch = 0 : i64, scratch_operands = 2 : i64, tpu.core_type = #tpu.core_type<tc>, window_params = [{transform_indices = @transform_0, window_bounds = array<i64: 1, 8, 256>}, {transform_indices = @transform_1, window_bounds = array<i64: 1, 1, 256>}, {transform_indices = @transform_2, window_bounds = array<i64: 1, 1, 8, 1>}, {transform_indices = @transform_3, window_bounds = array<i64: 1, 1, 8, 1>}]} {
    %c0_i32 = arith.constant 0 : i32
    %0 = arith.cmpi eq, %arg2, %c0_i32 : i32
    %1 = arith.extui %0 : i1 to i32
    %c0_i32_0 = arith.constant 0 : i32
    %2 = arith.cmpi ne, %1, %c0_i32_0 : i32
    scf.if %2 {
      %cst_18 = arith.constant 0.000000e+00 : f32
      %34 = vector.broadcast %cst_18 : f32 to vector<8x256xf32>
      %c0_19 = arith.constant 0 : index
      %c0_20 = arith.constant 0 : index
      %35 = vector.load %arg7[%c0_19, %c0_20] : memref<8x256xf32, #tpu.memory_space<vmem>>, vector<8x256xf32>
      tpu.vector_store %arg7[%c0_19, %c0_20], %34 {strides = array<i32>} : memref<8x256xf32, #tpu.memory_space<vmem>>, vector<8x256xf32>,
      %cst_21 = arith.constant 0.000000e+00 : f32
      %36 = vector.broadcast %cst_21 : f32 to vector<8x256xf32>
      %c0_22 = arith.constant 0 : index
      %c0_23 = arith.constant 0 : index
      %37 = vector.load %arg8[%c0_22, %c0_23] : memref<8x256xf32, #tpu.memory_space<vmem>>, vector<8x256xf32>
      tpu.vector_store %arg8[%c0_22, %c0_23], %36 {strides = array<i32>} : memref<8x256xf32, #tpu.memory_space<vmem>>, vector<8x256xf32>,
    } else {
    }
    %c0 = arith.constant 0 : index
    %c0_1 = arith.constant 0 : index
    %c0_2 = arith.constant 0 : index
    %3 = vector.load %arg3[%c0, %c0_1, %c0_2] : memref<1x8x256xf32, #tpu.memory_space<vmem>>, vector<1x8x256xf32>
    %4 = vector.shape_cast %3 : vector<1x8x256xf32> to vector<8x256xf32>
    %c0_3 = arith.constant 0 : index
    %c0_4 = arith.constant 0 : index
    %c0_5 = arith.constant 0 : index
    %5 = vector.load %arg4[%c0_3, %c0_4, %c0_5] : memref<1x1x256xi32, #tpu.memory_space<vmem>>, vector<1x1x256xi32>
    %6 = vector.shape_cast %5 : vector<1x1x256xi32> to vector<1x256xi32>
    %cst = arith.constant dense<0xFF800000> : vector<256xf32>
    %7 = vector.multi_reduction <maximumf>, %4, %cst [0] : vector<8x256xf32> to vector<256xf32>
    %8 = vector.shape_cast %7 : vector<256xf32> to vector<1x256xf32>
    %9 = vector.broadcast %8 : vector<1x256xf32> to vector<8x256xf32>
    %10 = arith.subf %4, %9 : vector<8x256xf32>
    %11 = math.exp %10 : vector<8x256xf32>
    %cst_6 = arith.constant dense<0.000000e+00> : vector<256xf32>
    %12 = vector.multi_reduction <add>, %11, %cst_6 [0] : vector<8x256xf32> to vector<256xf32>
    %13 = vector.shape_cast %12 : vector<256xf32> to vector<1x256xf32>
    %14 = math.log %13 : vector<1x256xf32>
    %15 = arith.addf %14, %8 : vector<1x256xf32>
    %16 = tpu.iota {dimensions = array<i32: 0>} : vector<8x256xi32>
    %17 = vector.broadcast %6 : vector<1x256xi32> to vector<8x256xi32>
    %18 = arith.cmpi eq, %16, %17 : vector<8x256xi32>
    %19 = vector.broadcast %15 : vector<1x256xf32> to vector<8x256xf32>
    %20 = arith.subf %19, %4 : vector<8x256xf32>
    %cst_7 = arith.constant 0.000000e+00 : f32
    %21 = vector.broadcast %cst_7 : f32 to vector<8x256xf32>
    %22 = arith.select %18, %20, %21 : vector<8x256xi1>, vector<8x256xf32>
    %23 = arith.extui %18 : vector<8x256xi1> to vector<8x256xi32>
    %24 = arith.sitofp %23 : vector<8x256xi32> to vector<8x256xf32>
    %c0_8 = arith.constant 0 : index
    %c0_9 = arith.constant 0 : index
    %25 = vector.load %arg7[%c0_8, %c0_9] : memref<8x256xf32, #tpu.memory_space<vmem>>, vector<8x256xf32>
    %26 = arith.addf %25, %22 : vector<8x256xf32>
    %c0_10 = arith.constant 0 : index
    %c0_11 = arith.constant 0 : index
    %27 = vector.load %arg7[%c0_10, %c0_11] : memref<8x256xf32, #tpu.memory_space<vmem>>, vector<8x256xf32>
    tpu.vector_store %arg7[%c0_10, %c0_11], %26 {strides = array<i32>} : memref<8x256xf32, #tpu.memory_space<vmem>>, vector<8x256xf32>,
    %c0_12 = arith.constant 0 : index
    %c0_13 = arith.constant 0 : index
    %28 = vector.load %arg8[%c0_12, %c0_13] : memref<8x256xf32, #tpu.memory_space<vmem>>, vector<8x256xf32>
    %29 = arith.addf %28, %24 : vector<8x256xf32>
    %c0_14 = arith.constant 0 : index
    %c0_15 = arith.constant 0 : index
    %30 = vector.load %arg8[%c0_14, %c0_15] : memref<8x256xf32, #tpu.memory_space<vmem>>, vector<8x256xf32>
    tpu.vector_store %arg8[%c0_14, %c0_15], %29 {strides = array<i32>} : memref<8x256xf32, #tpu.memory_space<vmem>>, vector<8x256xf32>,
    %c0_i32_16 = arith.constant 0 : i32
    %31 = arith.cmpi eq, %arg2, %c0_i32_16 : i32
    %32 = arith.extui %31 : i1 to i32
    %c0_i32_17 = arith.constant 0 : i32
    %33 = arith.cmpi ne, %32, %c0_i32_17 : i32
    scf.if %33 {
      %c0_18 = arith.constant 0 : index
      %c0_19 = arith.constant 0 : index
      %34 = vector.load %arg7[%c0_18, %c0_19] : memref<8x256xf32, #tpu.memory_space<vmem>>, vector<8x256xf32>
      %cst_20 = arith.constant dense<0.000000e+00> : vector<8xf32>
      %35 = vector.multi_reduction <add>, %34, %cst_20 [1] : vector<8x256xf32> to vector<8xf32>
      %36 = vector.shape_cast %35 : vector<8xf32> to vector<8x1xf32>
      %c0_21 = arith.constant 0 : index
      %c0_22 = arith.constant 0 : index
      %c0_23 = arith.constant 0 : index
      %c0_24 = arith.constant 0 : index
      %37 = vector.load %arg5[%c0_21, %c0_22, %c0_23, %c0_24] : memref<1x1x8x1xf32, #tpu.memory_space<vmem>>, vector<1x1x8x1xf32>
      %38 = vector.shape_cast %37 : vector<1x1x8x1xf32> to vector<8x1xf32>
      %39 = vector.shape_cast %36 : vector<8x1xf32> to vector<1x1x8x1xf32>
      tpu.vector_store %arg5[%c0_21, %c0_22, %c0_23, %c0_24], %39 {strides = array<i32>} : memref<1x1x8x1xf32, #tpu.memory_space<vmem>>, vector<1x1x8x1xf32>,
      %c0_25 = arith.constant 0 : index
      %c0_26 = arith.constant 0 : index
      %40 = vector.load %arg8[%c0_25, %c0_26] : memref<8x256xf32, #tpu.memory_space<vmem>>, vector<8x256xf32>
      %cst_27 = arith.constant dense<0.000000e+00> : vector<8xf32>
      %41 = vector.multi_reduction <add>, %40, %cst_27 [1] : vector<8x256xf32> to vector<8xf32>
      %42 = vector.shape_cast %41 : vector<8xf32> to vector<8x1xf32>
      %c0_28 = arith.constant 0 : index
      %c0_29 = arith.constant 0 : index
      %c0_30 = arith.constant 0 : index
      %c0_31 = arith.constant 0 : index
      %43 = vector.load %arg6[%c0_28, %c0_29, %c0_30, %c0_31] : memref<1x1x8x1xf32, #tpu.memory_space<vmem>>, vector<1x1x8x1xf32>
      %44 = vector.shape_cast %43 : vector<1x1x8x1xf32> to vector<8x1xf32>
      %45 = vector.shape_cast %42 : vector<8x1xf32> to vector<1x1x8x1xf32>
      tpu.vector_store %arg6[%c0_28, %c0_29, %c0_30, %c0_31], %45 {strides = array<i32>} : memref<1x1x8x1xf32, #tpu.memory_space<vmem>>, vector<1x1x8x1xf32>,
    } else {
    }
    return
  }
  func.func @transform_0(%arg0: i32, %arg1: i32, %arg2: i32) -> (i32, i32, i32) {
    %c1_i32 = arith.constant 1 : i32
    %0 = arith.muli %arg1, %c1_i32 : i32
    %1 = arith.addi %0, %arg2 : i32
    %c0_i32 = arith.constant 0 : i32
    %c0_i32_0 = arith.constant 0 : i32
    return %arg0, %c0_i32, %1 : i32, i32, i32
  }
  func.func @transform_1(%arg0: i32, %arg1: i32, %arg2: i32) -> (i32, i32, i32) {
    %c1_i32 = arith.constant 1 : i32
    %0 = arith.muli %arg1, %c1_i32 : i32
    %1 = arith.addi %0, %arg2 : i32
    %c0_i32 = arith.constant 0 : i32
    %c0_i32_0 = arith.constant 0 : i32
    return %arg0, %c0_i32, %1 : i32, i32, i32
  }
  func.func @transform_2(%arg0: i32, %arg1: i32, %arg2: i32) -> (i32, i32, i32, i32) {
    %c0_i32 = arith.constant 0 : i32
    %c0_i32_0 = arith.constant 0 : i32
    %c0_i32_1 = arith.constant 0 : i32
    return %arg0, %arg1, %c0_i32, %c0_i32_0 : i32, i32, i32, i32
  }
  func.func @transform_3(%arg0: i32, %arg1: i32, %arg2: i32) -> (i32, i32, i32, i32) {
    %c0_i32 = arith.constant 0 : i32
    %c0_i32_0 = arith.constant 0 : i32
    %c0_i32_1 = arith.constant 0 : i32
    return %arg0, %arg1, %c0_i32, %c0_i32_0 : i32, i32, i32, i32
  }
}

</mosaic_0001>

<llo_original>
// kernel: weighted_cross_entropy.1
$region0: #{weighted_cross_entropy.1}
  #allocation0 [shape = 'u32[]', space=smem, size = 0x4, offset = 0x4, fixed_abs, tag = 'smem constant byte address 0x4 - core index']
  #allocation1 [shape = 'u32[144,128]{1,0:T(1,128)}', space=vmem, size = 0x12000, scoped, tag = 'internal scratch']
  #allocation2 [shape = 'f32[8,256]{1,0:T(8,128)}', space=vmem, size = 0x2000, scoped, tag = 'scratch operand']
  #allocation3 [shape = 'f32[8,256]{1,0:T(8,128)}', space=vmem, size = 0x2000, scoped, tag = 'scratch operand']
  %s0 = inlined_call_operand.vmem [shape: f32[2,8,256], index: 0, kind: input, shape index: {}]
  %s1 = inlined_call_operand.vmem [shape: s32[2,1,256], index: 1, kind: input, shape index: {}]
  %s2 = inlined_call_operand.vmem [shape: f32[2,1,8,1], index: 2, kind: output, shape index: {0}]
  %s3 = inlined_call_operand.vmem [shape: f32[2,1,8,1], index: 3, kind: output, shape index: {1}]
  %4 = xla_tuple %s2, %s3
  %s5 = sld [smem:[#allocation0]]
  $region57: #{weighted_cross_entropy.1} parent=0
    _
  %s7 = ssub.s32 1, %s5
  %s8 = scalar_select 0, %s7, %s5
  loop: start=0, step=1, limit=4
  $region2: #{weighted_cross_entropy.1} parent=0 // loop_pre_header
    _
  $region3: #{weighted_cross_entropy.1} parent=0 // loop_header
    %s10 = sphi 0, %s14
    %p11 = scmp.ge.s32.totalorder %s10, 4
    %s17 = sphi 0, %s36
    %s18 = sphi 0, %s32
    %s19 = sphi 0, %s28
    %s20 = sphi 0, %s17
    %s21 = sphi 0, %s18
    %s22 = sphi 0, %s19
    %s23 = sphi 0, %s20
    %s24 = sphi 0, %s21
    %s25 = sphi 0, %s22
    %s43 = sphi 0, %s45
    %s46 = sphi 0, %s43
    %s47 = sphi 0, %s46
    %s63 = sphi 0, %s47
    %s73 = sphi 0, %s75
    %s76 = sphi 0, %s73
    %s77 = sphi 0, %s76
    %s93 = sphi 0, %s77
    %s101 = sphi 0, %s103
    %s104 = sphi 0, %s101
    %s105 = sphi 0, %s104
    %s121 = sphi 0, %s105
    %s129 = sphi 0, %s131
    %s132 = sphi 0, %s129
    %s133 = sphi 0, %s132
    %s149 = sphi 0, %s133
  $region4: #{weighted_cross_entropy.1} parent=0 // loop_header_branch
    %13 = sbr.rel (%p11) target = $region8
  $region5: #{weighted_cross_entropy.1} parent=0 // loop_body
    %s15 = ssub.s32 %s10, 1
    %s16 = ssub.s32 %s10, 2
    %s26 = sadd.s32 1, %s19
    %p27 = scmp.ge.s32.totalorder %s26, 1
    %s28 = scalar_select %p27, 0, %s26
    %s29 = sadd.s32 1, %s18
    %s30 = scalar_select %p27, %s29, %s18
    %p31 = scmp.ge.s32.totalorder %s30, 1
    %s32 = scalar_select %p31, 0, %s30
    %s33 = sadd.s32 1, %s17
    %s34 = scalar_select %p31, %s33, %s17
    %p35 = scmp.ge.s32.totalorder %s34, 2
    %s36 = scalar_select %p35, 0, %s34
    %s37 = sadd.s32 %s18, %s19
    %s38 = sadd.s32 %s32, %s28
    %s39 = ssub.s32 %s17, %s36
    %s40 = ssub.s32 %s37, %s38
    %s41 = sor.u32 %s39, %s40
    %p42 = scmp.eq.s32.totalorder %s41, 0
    %s44 = sadd.s32 %s43, 1
    %s45 = scalar_select %p42, %s43, %s44
    %p48 = pneg %p42
    %p49 = scmp.eq.s32.totalorder %s10, 1
    %p50 = por %p48, %p49
    %p51 = scmp.ne.s32.totalorder %s43, %s46
    %p52 = scmp.eq.s32.totalorder %s10, 0
    %p53 = por %p51, %p52
    %p54 = scmp.ne.s32.totalorder %s43, %s46
    %p55 = scmp.eq.s32.totalorder %s15, 1
    %p56 = por %p54, %p55
    %p57 = scmp.ne.s32.totalorder %s46, %s47
    %p58 = scmp.eq.s32.totalorder %s15, 0
    %p59 = por %p57, %p58
    %p60 = scmp.ne.s32.totalorder %s46, %s47
    %p61 = scmp.eq.s32.totalorder %s16, 1
    %p62 = por %p60, %p61
    %p64 = scmp.ne.s32.totalorder %s47, %s63
    %p65 = scmp.eq.s32.totalorder %s16, 0
    %p66 = por %p64, %p65
    %s67 = sadd.s32 %s18, %s19
    %s68 = sadd.s32 %s32, %s28
    %s69 = ssub.s32 %s17, %s36
    %s70 = ssub.s32 %s67, %s68
    %s71 = sor.u32 %s69, %s70
    %p72 = scmp.eq.s32.totalorder %s71, 0
    %s74 = sadd.s32 %s73, 1
    %s75 = scalar_select %p72, %s73, %s74
    %p78 = pneg %p72
    %p79 = scmp.eq.s32.totalorder %s10, 1
    %p80 = por %p78, %p79
    %p81 = scmp.ne.s32.totalorder %s73, %s76
    %p82 = scmp.eq.s32.totalorder %s10, 0
    %p83 = por %p81, %p82
    %p84 = scmp.ne.s32.totalorder %s73, %s76
    %p85 = scmp.eq.s32.totalorder %s15, 1
    %p86 = por %p84, %p85
    %p87 = scmp.ne.s32.totalorder %s76, %s77
    %p88 = scmp.eq.s32.totalorder %s15, 0
    %p89 = por %p87, %p88
    %p90 = scmp.ne.s32.totalorder %s76, %s77
    %p91 = scmp.eq.s32.totalorder %s16, 1
    %p92 = por %p90, %p91
    %p94 = scmp.ne.s32.totalorder %s77, %s93
    %p95 = scmp.eq.s32.totalorder %s16, 0
    %p96 = por %p94, %p95
    %s97 = ssub.s32 %s17, %s36
    %s98 = ssub.s32 %s18, %s32
    %s99 = sor.u32 %s97, %s98
    %p100 = scmp.eq.s32.totalorder %s99, 0
    %s102 = sadd.s32 %s101, 1
    %s103 = scalar_select %p100, %s101, %s102
    %p106 = pneg %p100
    %p107 = scmp.eq.s32.totalorder %s10, 1
    %p108 = por %p106, %p107
    %p109 = scmp.ne.s32.totalorder %s101, %s104
    %p110 = scmp.eq.s32.totalorder %s10, 0
    %p111 = por %p109, %p110
    %p112 = scmp.ne.s32.totalorder %s101, %s104
    %p113 = scmp.eq.s32.totalorder %s15, 1
    %p114 = por %p112, %p113
    %p115 = scmp.ne.s32.totalorder %s104, %s105
    %p116 = scmp.eq.s32.totalorder %s15, 0
    %p117 = por %p115, %p116
    %p118 = scmp.ne.s32.totalorder %s104, %s105
    %p119 = scmp.eq.s32.totalorder %s16, 1
    %p120 = por %p118, %p119
    %p122 = scmp.ne.s32.totalorder %s105, %s121
    %p123 = scmp.eq.s32.totalorder %s16, 0
    %p124 = por %p122, %p123
    %s125 = ssub.s32 %s17, %s36
    %s126 = ssub.s32 %s18, %s32
    %s127 = sor.u32 %s125, %s126
    %p128 = scmp.eq.s32.totalorder %s127, 0
    %s130 = sadd.s32 %s129, 1
    %s131 = scalar_select %p128, %s129, %s130
    %p134 = pneg %p128
    %p135 = scmp.eq.s32.totalorder %s10, 1
    %p136 = por %p134, %p135
    %p137 = scmp.ne.s32.totalorder %s129, %s132
    %p138 = scmp.eq.s32.totalorder %s10, 0
    %p139 = por %p137, %p138
    %p140 = scmp.ne.s32.totalorder %s129, %s132
    %p141 = scmp.eq.s32.totalorder %s15, 1
    %p142 = por %p140, %p141
    %p143 = scmp.ne.s32.totalorder %s132, %s133
    %p144 = scmp.eq.s32.totalorder %s15, 0
    %p145 = por %p143, %p144
    %p146 = scmp.ne.s32.totalorder %s132, %s133
    %p147 = scmp.eq.s32.totalorder %s16, 1
    %p148 = por %p146, %p147
    %p150 = scmp.ne.s32.totalorder %s133, %s149
    %p151 = scmp.eq.s32.totalorder %s16, 0
    %p152 = por %p150, %p151
    %p153 = scmp.le.s32.totalorder 1, %s10
    %p154 = scmp.lt.s32.totalorder %s10, 3
    %p155 = pnand %p153, %p154
    %p156 = pneg %p155
    // Predicated region
    $region9: #{weighted_cross_entropy.1} parent=5 // pred_check
      _
    $region10: #{weighted_cross_entropy.1} parent=5 // pred_check_branch
      %158 = sbr.rel (%p155) target = $region12
    $region11: #{weighted_cross_entropy.1} parent=5 // pred_region
      %s159 = ssub.s32 %s10, 1
    $region12: #{weighted_cross_entropy.1} parent=5 // pred_fallthru
      _
    %p160 = scmp.lt.s32.totalorder %s10, 2
    // Predicated region
    $region13: #{weighted_cross_entropy.1} parent=5 // pred_check
      %p161 = pneg %p160
    $region14: #{weighted_cross_entropy.1} parent=5 // pred_check_branch
      %163 = sbr.rel (%p161) target = $region16
    $region15: #{weighted_cross_entropy.1} parent=5 // pred_region
      // Predicated region
      $region17: #{weighted_cross_entropy.1} parent=15 // pred_check
        %p164 = pneg %p53
      $region18: #{weighted_cross_entropy.1} parent=15 // pred_check_branch
        %166 = sbr.rel (%p164) target = $region20
      $region19: #{weighted_cross_entropy.1} parent=15 // pred_region
        %s167 = sadd.s32 %s18, %s19
        %s168 = smul.u32 2, %s167
        %p169 = scmp.lt.s32.totalorder %s17, 1
        %s170 = scalar_select %p169, %s17, 1
        %p171 = scmp.lt.s32.totalorder %s168, 1
        %s172 = scalar_select %p171, %s168, 1
        %s173 = smul.addr %s170, 2
        %s174 = sadd.s32 %s172, %s173
        %s175 = smul.addr %s174, 8
        %s176 = scalar_lea.vmem %s0, %s175
        %s177 = sadd.s32 %s18, %s19
        %s178 = smul.u32 2, %s177
      $region20: #{weighted_cross_entropy.1} parent=15 // pred_fallthru
        _
      // Predicated region
      $region21: #{weighted_cross_entropy.1} parent=15 // pred_check
        %p179 = pneg %p83
      $region22: #{weighted_cross_entropy.1} parent=15 // pred_check_branch
        %181 = sbr.rel (%p179) target = $region24
      $region23: #{weighted_cross_entropy.1} parent=15 // pred_region
        %s182 = sadd.s32 %s18, %s19
        %s183 = smul.u32 2, %s182
        %p184 = scmp.lt.s32.totalorder %s17, 1
        %s185 = scalar_select %p184, %s17, 1
        %p186 = scmp.lt.s32.totalorder %s183, 1
        %s187 = scalar_select %p186, %s183, 1
        %s188 = smul.addr %s185, 2
        %s189 = sadd.s32 %s187, %s188
        %s190 = scalar_lea.vmem %s1, %s189
        %s191 = sadd.s32 %s18, %s19
        %s192 = smul.u32 2, %s191
      $region24: #{weighted_cross_entropy.1} parent=15 // pred_fallthru
        _
    $region16: #{weighted_cross_entropy.1} parent=5 // pred_fallthru
      _
    %p193 = scmp.le.s32.totalorder 1, %s10
    %p194 = scmp.lt.s32.totalorder %s10, 3
    %p195 = pnand %p193, %p194
    %p196 = pneg %p195
    // Predicated region
    $region25: #{weighted_cross_entropy.1} parent=5 // pred_check
      _
    $region26: #{weighted_cross_entropy.1} parent=5 // pred_check_branch
      %198 = sbr.rel (%p195) target = $region28
    $region27: #{weighted_cross_entropy.1} parent=5 // pred_region
      %s199 = ssub.s32 %s10, 1
      %s200 = sadd.s32 %s21, %s22
      %s201 = smul.u32 2, %s200
      %p202 = scmp.lt.s32.totalorder %s20, 1
      %s203 = scalar_select %p202, %s20, 1
      %p204 = scmp.lt.s32.totalorder %s201, 1
      %s205 = scalar_select %p204, %s201, 1
      %s206 = smul.addr %s203, 2
      %s207 = sadd.s32 %s205, %s206
      %s208 = smul.addr %s207, 8
      %s209 = scalar_lea.vmem %s0, %s208
      %p210 = pneg %p59
      %p211 = pneg %p56
      %s212 = sadd.s32 %s21, %s22
      %s213 = smul.u32 2, %s212
      %p214 = scmp.lt.s32.totalorder %s20, 1
      %s215 = scalar_select %p214, %s20, 1
      %p216 = scmp.lt.s32.totalorder %s213, 1
      %s217 = scalar_select %p216, %s213, 1
      %s218 = smul.addr %s215, 2
      %s219 = sadd.s32 %s217, %s218
      %s220 = scalar_lea.vmem %s1, %s219
      %p221 = pneg %p89
      %p222 = pneg %p86
      %p223 = pneg %p117
      %p224 = pneg %p114
      %p225 = scmp.lt.s32.totalorder %s20, 1
      %s226 = scalar_select %p225, %s20, 1
      %p227 = scmp.lt.s32.totalorder %s21, 0
      %s228 = scalar_select %p227, %s21, 0
      %s229 = sadd.s32 %s228, %s226
      %s230 = smul.addr %s229, 8
      %s231 = scalar_lea.vmem %s2, %s230
      %p232 = pneg %p145
      %p233 = pneg %p142
      %p234 = scmp.lt.s32.totalorder %s20, 1
      %s235 = scalar_select %p234, %s20, 1
      %p236 = scmp.lt.s32.totalorder %s21, 0
      %s237 = scalar_select %p236, %s21, 0
      %s238 = sadd.s32 %s237, %s235
      %s239 = smul.addr %s238, 8
      %s240 = scalar_lea.vmem %s3, %s239
      %s241 = sadd.s32 %s21, %s22
      %s242 = smul.u32 2, %s241
      %p243 = scmp.lt.s32.totalorder %s20, 1
      %s244 = scalar_select %p243, %s20, 1
      %p245 = scmp.lt.s32.totalorder %s242, 1
      %s246 = scalar_select %p245, %s242, 1
      %s247 = smul.addr %s244, 2
      %s248 = sadd.s32 %s246, %s247
      %s249 = smul.addr %s248, 8
      %s250 = scalar_lea.vmem %s0, %s249
      %s251 = sadd.s32 %s21, %s22
      %s252 = smul.u32 2, %s251
      %s253 = sadd.s32 %s21, %s22
      %s254 = smul.u32 2, %s253
      %p255 = scmp.lt.s32.totalorder %s20, 1
      %s256 = scalar_select %p255, %s20, 1
      %p257 = scmp.lt.s32.totalorder %s254, 1
      %s258 = scalar_select %p257, %s254, 1
      %s259 = smul.addr %s256, 2
      %s260 = sadd.s32 %s258, %s259
      %s261 = scalar_lea.vmem %s1, %s260
      %s262 = sadd.s32 %s21, %s22
      %s263 = smul.u32 2, %s262
      %p264 = scmp.lt.s32.totalorder %s20, 1
      %s265 = scalar_select %p264, %s20, 1
      %p266 = scmp.lt.s32.totalorder %s21, 0
      %s267 = scalar_select %p266, %s21, 0
      %s268 = sadd.s32 %s267, %s265
      %s269 = smul.addr %s268, 8
      %s270 = scalar_lea.vmem %s2, %s269
      %p271 = scmp.lt.s32.totalorder %s20, 1
      %s272 = scalar_select %p271, %s20, 1
      %p273 = scmp.lt.s32.totalorder %s21, 0
      %s274 = scalar_select %p273, %s21, 0
      %s275 = sadd.s32 %s274, %s272
      %s276 = smul.addr %s275, 8
      %s277 = scalar_lea.vmem %s3, %s276
      %p278 = scmp.eq.s32.totalorder %s22, 0
      // Predicated region
      $region29: #{weighted_cross_entropy.1} parent=27 // pred_check
        %p279 = pneg %p278
      $region30: #{weighted_cross_entropy.1} parent=27 // pred_check_branch
        %281 = sbr.rel (%p279) target = $region32
      $region31: #{weighted_cross_entropy.1} parent=27 // pred_region
        %282 = vst [vmem:[#allocation2] sm:$0xff] 0.0
        %283 = vst [vmem:[#allocation2 + $0x8] sm:$0xff] 0.0
        %284 = vst [vmem:[#allocation3] sm:$0xff] 0.0
        %285 = vst [vmem:[#allocation3 + $0x8] sm:$0xff] 0.0
      $region32: #{weighted_cross_entropy.1} parent=27 // pred_fallthru
        _
      %v286 = vld [vmem:[%s250] sm:$0xff]
      %v287 = vld [vmem:[%s250 + $0x8] sm:$0xff]
      %v288 = vld [vmem:[%s261] sm:$0x3]
      %v289 = vrot.slane %v286, 4
      %v290 = vmax.f32 %v286, %v289
      %v291 = vrot.slane %v290, 2
      %v292 = vmax.f32 %v290, %v291
      %v293 = vrot.slane %v292, 1
      %v294 = vmax.f32 %v292, %v293
      %v295 = vrot.slane %v287, 4
      %v296 = vmax.f32 %v287, %v295
      %v297 = vrot.slane %v296, 2
      %v298 = vmax.f32 %v296, %v297
      %v299 = vrot.slane %v298, 1
      %v300 = vmax.f32 %v298, %v299
      %v301 = vsub.f32 %v286, %v294
      %v302 = vsub.f32 %v287, %v300
      %v303 = vmul.f32 %v301, 1.442695
      %v304 = vpow.pop %v303
      %v305 = vmul.f32 %v302, 1.442695
      %v306 = vpow.pop %v305
      %v307 = vrot.slane %v304, 4
      %v308 = vadd.f32 %v304, %v307
      %v309 = vrot.slane %v308, 2
      %v310 = vadd.f32 %v308, %v309
      %v311 = vrot.slane %v310, 1
      %v312 = vadd.f32 %v310, %v311
      %v313 = vrot.slane %v306, 4
      %v314 = vadd.f32 %v306, %v313
      %v315 = vrot.slane %v314, 2
      %v316 = vadd.f32 %v314, %v315
      %v317 = vrot.slane %v316, 1
      %v318 = vadd.f32 %v316, %v317
      %v319 = vlog2.pop %v312
      %v320 = vmul.f32 %v319, 0.6931472
      %v321 = vlog2.pop %v318
      %v322 = vmul.f32 %v321, 0.6931472
      %v323 = vadd.f32 %v320, %v294
      %v324 = vadd.f32 %v322, %v300
      %v325 = vlaneseq
      %v326 = vshrl.u32 %v325, 7
      %v327 = vlaneseq
      %v328 = vshrl.u32 %v327, 7
      %v329 = vsub.s32 0, %v328
      %v330 = vrot.slane %v288, %v329
      %v331 = vlaneseq
      %v332 = vshrl.u32 %v331, 7
      %v333 = vsub.s32 1, %v332
      %v334 = vrot.slane %v288, %v333
      %vm335 = vcmp.eq.s32.totalorder %v326, %v330
      %vm336 = vcmp.eq.s32.totalorder %v326, %v334
      %v337 = vsub.f32 %v323, %v286
      %v338 = vsub.f32 %v324, %v287
      %v339 = vsel %vm335, %v337, 0.0
      %v340 = vsel %vm336, %v338, 0.0
      %v341 = vsel %vm335, 1, 0
      %v342 = vsel %vm336, 1, 0
      %v343 = vcvt.s32.f32 %v341
      %v344 = vcvt.s32.f32 %v342
      %v345 = vld [vmem:[#allocation2] sm:$0xff]
      %v346 = vld [vmem:[#allocation2 + $0x8] sm:$0xff]
      %v347 = vadd.f32 %v345, %v339
      %v348 = vadd.f32 %v346, %v340
      %349 = vst [vmem:[#allocation2] sm:$0xff] %v347
      %350 = vst [vmem:[#allocation2 + $0x8] sm:$0xff] %v348
      %v351 = vld [vmem:[#allocation3] sm:$0xff]
      %v352 = vld [vmem:[#allocation3 + $0x8] sm:$0xff]
      %v353 = vadd.f32 %v351, %v343
      %v354 = vadd.f32 %v352, %v344
      %355 = vst [vmem:[#allocation3] sm:$0xff] %v353
      %356 = vst [vmem:[#allocation3 + $0x8] sm:$0xff] %v354
      // Predicated region
      $region33: #{weighted_cross_entropy.1} parent=27 // pred_check
        %p357 = pneg %p278
      $region34: #{weighted_cross_entropy.1} parent=27 // pred_check_branch
        %359 = sbr.rel (%p357) target = $region36
      $region35: #{weighted_cross_entropy.1} parent=27 // pred_region
        %v360 = vld [vmem:[#allocation2] sm:$0xff]
        %v361 = vld [vmem:[#allocation2 + $0x8] sm:$0xff]
        %v362 = vadd.f32 %v360, %v361
        %363 = vadd.xlane.f32.xlu0 %v362
        %v364 = vpop.xlane.xlu0 %363
        %vm365 = vcmask 7168
        %366 = vst.msk [vmem:[%s270] sm:$0xff] %vm365, %v364
        %v367 = vld [vmem:[#allocation3] sm:$0xff]
        %v368 = vld [vmem:[#allocation3 + $0x8] sm:$0xff]
        %v369 = vadd.f32 %v367, %v368
        %370 = vadd.xlane.f32.xlu0 %v369
        %v371 = vpop.xlane.xlu0 %370
        %372 = vst.msk [vmem:[%s277] sm:$0xff] %vm365, %v371
      $region36: #{weighted_cross_entropy.1} parent=27 // pred_fallthru
        _
      %p373 = scmp.lt.s32.totalorder %s20, 1
      %s374 = scalar_select %p373, %s20, 1
      %p375 = scmp.lt.s32.totalorder %s21, 0
      %s376 = scalar_select %p375, %s21, 0
      %s377 = sadd.s32 %s376, %s374
      %s378 = smul.addr %s377, 8
      %s379 = scalar_lea.vmem %s2, %s378
      %p380 = scmp.lt.s32.totalorder %s20, 1
      %s381 = scalar_select %p380, %s20, 1
      %p382 = scmp.lt.s32.totalorder %s21, 0
      %s383 = scalar_select %p382, %s21, 0
      %s384 = sadd.s32 %s383, %s381
      %s385 = smul.addr %s384, 8
      %s386 = scalar_lea.vmem %s3, %s385
      // Predicated region
      $region37: #{weighted_cross_entropy.1} parent=27 // pred_check
        %p387 = pneg %p114
      $region38: #{weighted_cross_entropy.1} parent=27 // pred_check_branch
        %389 = sbr.rel (%p387) target = $region40
      $region39: #{weighted_cross_entropy.1} parent=27 // pred_region
        _
      $region40: #{weighted_cross_entropy.1} parent=27 // pred_fallthru
        _
      // Predicated region
      $region41: #{weighted_cross_entropy.1} parent=27 // pred_check
        %p390 = pneg %p142
      $region42: #{weighted_cross_entropy.1} parent=27 // pred_check_branch
        %392 = sbr.rel (%p390) target = $region44
      $region43: #{weighted_cross_entropy.1} parent=27 // pred_region
        _
      $region44: #{weighted_cross_entropy.1} parent=27 // pred_fallthru
        _
    $region28: #{weighted_cross_entropy.1} parent=5 // pred_fallthru
      _
    %p393 = scmp.le.s32.totalorder 2, %s10
    // Predicated region
    $region45: #{weighted_cross_entropy.1} parent=5 // pred_check
      %p394 = pneg %p393
    $region46: #{weighted_cross_entropy.1} parent=5 // pred_check_branch
      %396 = sbr.rel (%p394) target = $region48
    $region47: #{weighted_cross_entropy.1} parent=5 // pred_region
      %s397 = ssub.s32 %s10, 2
      // Predicated region
      $region49: #{weighted_cross_entropy.1} parent=47 // pred_check
        %p398 = pneg %p120
      $region50: #{weighted_cross_entropy.1} parent=47 // pred_check_branch
        %400 = sbr.rel (%p398) target = $region52
      $region51: #{weighted_cross_entropy.1} parent=47 // pred_region
        %p401 = scmp.lt.s32.totalorder %s23, 1
        %s402 = scalar_select %p401, %s23, 1
        %p403 = scmp.lt.s32.totalorder %s24, 0
        %s404 = scalar_select %p403, %s24, 0
        %s405 = sadd.s32 %s404, %s402
        %s406 = smul.addr %s405, 8
        %s407 = scalar_lea.vmem %s2, %s406
      $region52: #{weighted_cross_entropy.1} parent=47 // pred_fallthru
        _
      // Predicated region
      $region53: #{weighted_cross_entropy.1} parent=47 // pred_check
        %p408 = pneg %p148
      $region54: #{weighted_cross_entropy.1} parent=47 // pred_check_branch
        %410 = sbr.rel (%p408) target = $region56
      $region55: #{weighted_cross_entropy.1} parent=47 // pred_region
        %p411 = scmp.lt.s32.totalorder %s23, 1
        %s412 = scalar_select %p411, %s23, 1
        %p413 = scmp.lt.s32.totalorder %s24, 0
        %s414 = scalar_select %p413, %s24, 0
        %s415 = sadd.s32 %s414, %s412
        %s416 = smul.addr %s415, 8
        %s417 = scalar_lea.vmem %s3, %s416
      $region56: #{weighted_cross_entropy.1} parent=47 // pred_fallthru
        _
    $region48: #{weighted_cross_entropy.1} parent=5 // pred_fallthru
      _
  $region6: #{weighted_cross_entropy.1} parent=0 // loop_footer
    %s14 = sadd.s32 1, %s10
  $region7: #{weighted_cross_entropy.1} parent=0 // loop_footer_branch
    %9 = sbr.rel target = $region3
  $region8: #{weighted_cross_entropy.1} parent=0 // loop_exit
    _

</llo_original>
